<compile_context>
chip_gen: v6e
topology: v6e:2x2x1
jax: 0.10.0
libtpu: 0.0.40
codegen_flags: <defaults>
</compile_context>

<pallas_src>
import functools

import numpy as np
import jax
import jax.numpy as jnp
from jax.experimental import pallas as pl
from jax.experimental.pallas import tpu as pltpu


_ACC_ROWS = 8  # one vreg worth of sublanes


def _fold_rows(x_2d):
    """Fold (R, 128) into an (_ACC_ROWS, 128) vreg-shaped partial sum using only
    sublane-aligned VPU adds (no cross-lane reduce).  If R is not a multiple of
    _ACC_ROWS (tiny images only), the array is returned unchanged."""
    rows, lanes = x_2d.shape
    if rows % _ACC_ROWS:
        return x_2d
    return x_2d.reshape(-1, _ACC_ROWS, lanes).sum(axis=0)


def _acc_rows(rows):
    return _ACC_ROWS if rows % _ACC_ROWS == 0 else rows


def _as_bool_xla(m):
    if m.dtype == jnp.bool_:
        return m
    if jnp.issubdtype(m.dtype, jnp.integer):
        return m > 0
    return m > 0.5


def _vmem_limit_bytes():
    """Scoped-VMEM limit: half the physical capacity, capped at 48 MiB.
    v5e/v6e: 128 MiB physical -> 48 MiB limit; v7x: 64 MiB per TC -> 32 MiB.
    Fallback (query unavailable) assumes the smallest generation (v7x)."""
    try:
        cap = int(pltpu.get_tpu_info().vmem_capacity_bytes)
    except Exception:
        cap = 64 << 20
    return max(16 << 20, min(cap // 2, 48 << 20))


def _pick_tile_rows(tr_total, stream_bytes_per_row, budget_bytes):
    """Largest HW tile (in rows of 128 lanes) that divides tr_total, is a
    multiple of 8 sublanes, and keeps the per-step bytes of ALL input streams
    within budget_bytes (budget already accounts for x2 double buffering).
    Prefers (at <=2x shrink) an even tile count so the tile axis can be split
    across v7x's two TensorCores."""
    if tr_total % _ACC_ROWS != 0:
        return tr_total          # tiny / odd spatial size: single tile
    divisors = [r for r in range(_ACC_ROWS, tr_total + 1, _ACC_ROWS)
                if tr_total % r == 0]
    in_budget = [r for r in divisors if r * stream_bytes_per_row <= budget_bytes]
    if not in_budget:
        return _ACC_ROWS
    best = max(in_budget)
    if (tr_total // best) % 2:
        even = [r for r in in_budget if (tr_total // r) % 2 == 0]
        if even and max(even) * 2 >= best:
            best = max(even)
    return best


def _valid_region_ce_kernel(lbl_ref, tids_ref, tcnt_ref, *refs, pos_weight,
                            use_prostate_mask, use_needle_mask, emit_count,
                            tail_valid_px, tile_rows, p_split):
    # Unpack the statically-configured input/output refs.
    idx = 0
    logits_ref = refs[idx]; idx += 1
    pm_ref = nm_ref = None
    if use_prostate_mask:
        pm_ref = refs[idx]; idx += 1
    if use_needle_mask:
        nm_ref = refs[idx]; idx += 1
    loss_out = refs[idx]; idx += 1
    cnt_out = refs[idx] if emit_count else None

    b = pl.program_id(0)
    p = pl.program_id(1)
    t = pl.program_id(2)
    s = b * p_split + p

    # Zero the resident per-shard partial-sum blocks at the first tile step.
    @pl.when(t == 0)
    def _():
        loss_out[...] = jnp.zeros_like(loss_out)
        if emit_count:
            cnt_out[...] = jnp.zeros_like(cnt_out)

    # Skip compute (and, because the block index repeats, the DMA) for steps
    # beyond this shard's count of valid tiles.
    @pl.when(t < tcnt_ref[s])
    def _():
        x = logits_ref[...].astype(jnp.float32)               # (C, TR, 128)
        c, tr, lanes = x.shape

        def _as_bool(ref):
            m = ref[...]                                       # (TR, 128), native dtype
            if m.dtype == jnp.bool_:
                return m
            if jnp.issubdtype(m.dtype, jnp.integer):
                return m > 0
            return m > 0.5

        mask = None
        if use_prostate_mask:
            mask = _as_bool(pm_ref)
        if use_needle_mask:
            nmask = _as_bool(nm_ref)
            mask = nmask if mask is None else jnp.logical_and(mask, nmask)
        if mask is None and tail_valid_px is not None:
            # No user mask but HW was lane-padded: exclude the padded tail.
            tile_idx = tids_ref[s, t]
            row = jax.lax.broadcasted_iota(jnp.int32, (tr, lanes), 0)
            lane = jax.lax.broadcasted_iota(jnp.int32, (tr, lanes), 1)
            flat = (tile_idx * tile_rows + row) * 128 + lane
            mask = flat < tail_valid_px

        # Per-core scalar coefficients (scalar unit; broadcast in the mul).
        y = lbl_ref[b]
        coef_lin = 1.0 - y
        coef_sp = 1.0 + (pos_weight - 1.0) * y

        # Stable BCE-with-logits (torch pos_weight formulation):
        #   l = (1 - y) * x + (1 + (pw - 1) * y) * softplus(-x)
        # softplus(-x) = relu(-x) + log1p(exp(-|x|))  (no logaddexp selects).
        softplus_neg_x = jnp.maximum(-x, 0.0) + jnp.log1p(jnp.exp(-jnp.abs(x)))
        loss_elem = coef_lin * x + coef_sp * softplus_neg_x   # (C, TR, 128)
        if mask is not None:
            # where (not multiply): garbage outside the valid region must never
            # poison the sum, matching the gather-first PyTorch semantics.
            loss_elem = jnp.where(mask[None, :, :], loss_elem, 0.0)

        loss_out[...] += _fold_rows(loss_elem.reshape(c * tr, lanes))
        if emit_count:
            cnt_out[...] += _fold_rows(mask.astype(jnp.float32))


def cancer_detection_valid_region_loss(cancer_logits, prostate_mask, needle_mask,
                                       label, involvement=None, *,
                                       base_loss="ce", loss_pos_weight=1.0,
                                       use_prostate_mask=True, use_needle_mask=True,
                                       skip_empty_tiles=True):
    """JAX/Pallas equivalent of CancerDetectionValidRegionLoss.forward ('ce').

    skip_empty_tiles: run a cheap XLA pre-pass over the masks to skip DMA and
    compute for HW tiles with no valid pixel (a clear win for sparse needle
    regions and/or C > 1; disable if the valid region is known to be dense and
    masks are f32)."""
    if base_loss != "ce":
        # TODO(synk): 'ce_mae' / 'gce' / 'mae' variants (same masked-mean structure).
        raise NotImplementedError(f"base_loss={base_loss!r} not implemented")

    B, C, H, W = cancer_logits.shape
    assert prostate_mask.shape == (B, 1, H, W)
    assert needle_mask.shape == (B, 1, H, W)
    HW = H * W
    use_pm = bool(use_prostate_mask)
    use_nm = bool(use_needle_mask)
    has_mask = use_pm or use_nm

    # Native dtypes (no host up-casts); drop the size-1 mask channel (free reshape).
    logits = cancer_logits.reshape(B, C, HW)
    pm = prostate_mask.reshape(B, HW) if use_pm else None
    nm = needle_mask.reshape(B, HW) if use_nm else None

    # Pad HW up to a multiple of 128 lanes.  Padded pixels are excluded via the
    # zero-padded masks, or via an in-kernel iota tail mask when no masks exist.
    # TODO(synk): for ragged HW the jnp.pad below costs one extra read+write
    # pass over the logits; could be avoided by handling the <128px tail in a
    # tiny XLA epilogue.
    pad = (-HW) % 128
    if pad:
        logits = jnp.pad(logits, ((0, 0), (0, 0), (0, pad)))
        if use_pm:
            pm = jnp.pad(pm, ((0, 0), (0, pad)))
        if use_nm:
            nm = jnp.pad(nm, ((0, 0), (0, pad)))
    hw_p = HW + pad
    tr_total = hw_p // 128
    need_tail_mask = (pad > 0) and not has_mask

    # Sublane-dense layout: lane axis = 128, sublane axis = rows of 128 pixels.
    logits = logits.reshape(B, C, tr_total, 128)
    if use_pm:
        pm = pm.reshape(B, tr_total, 128)
    if use_nm:
        nm = nm.reshape(B, tr_total, 128)
    lbl = label.reshape(B).astype(jnp.float32)

    # --- Tile sizing: budget ALL double-buffered input streams against the
    # scoped-VMEM limit that we also set explicitly below. ---
    isz = lambda a: jnp.dtype(a.dtype).itemsize
    stream_bytes_per_row = 128 * (C * isz(logits)
                                  + (isz(pm) if use_pm else 0)
                                  + (isz(nm) if use_nm else 0))
    vmem_limit = _vmem_limit_bytes()
    # per-step budget = limit/4 : x2 double buffering uses half the limit, the
    # other half is headroom for accumulator blocks and compiler scratch.
    tile_rows = _pick_tile_rows(tr_total, stream_bytes_per_row, vmem_limit // 4)
    n_tiles = tr_total // tile_rows
    if tr_total % _ACC_ROWS == 0:
        assert tile_rows % _ACC_ROWS == 0  # fold path always active for real images

    # Megacore (v7x): split the tile axis by a "parallel" factor P.
    P = 2 if (n_tiles % 2 == 0 and n_tiles >= 2) else 1
    n_inner = n_tiles // P
    shard_base = (jnp.arange(B * P, dtype=jnp.int32) % P) * n_inner    # (B*P,)

    # --- Empty-tile skipping pre-pass -> scalar-prefetched tile schedule. ---
    if skip_empty_tiles and has_mask and n_tiles > 1:
        valid_px = None
        if use_pm:
            valid_px = _as_bool_xla(pm)
        if use_nm:
            nmb = _as_bool_xla(nm)
            valid_px = nmb if valid_px is None else jnp.logical_and(valid_px, nmb)
        tile_any = valid_px.reshape(B, n_tiles, tile_rows * 128).any(axis=-1)
        valid = tile_any.reshape(B * P, n_inner)
        pos = jnp.arange(n_inner, dtype=jnp.int32)
        key = jnp.where(valid, pos, n_inner + pos)     # valid tiles first, in order
        order = jnp.argsort(key, axis=1).astype(jnp.int32)
        counts = valid.sum(axis=1).astype(jnp.int32)
        # Duplicate-fill the tail with the last valid tile so the block index
        # repeats -> Pallas elides the DMA for the skipped steps.
        fill = jnp.minimum(pos[None, :], jnp.maximum(counts[:, None] - 1, 0))
        local = jnp.take_along_axis(order, fill, axis=1)
        tile_ids = (local + shard_base[:, None]).astype(jnp.int32)
        tile_cnt = counts
    else:
        tile_ids = (jnp.arange(n_inner, dtype=jnp.int32)[None, :]
                    + shard_base[:, None]).astype(jnp.int32)
        tile_cnt = jnp.full((B * P,), n_inner, dtype=jnp.int32)

    loss_rows = _acc_rows(C * tile_rows)
    cnt_rows = _acc_rows(tile_rows)

    kernel = functools.partial(
        _valid_region_ce_kernel,
        pos_weight=float(loss_pos_weight),
        use_prostate_mask=use_pm,
        use_needle_mask=use_nm,
        emit_count=has_mask,
        tail_valid_px=HW if need_tail_mask else None,
        tile_rows=tile_rows,
        p_split=P,
    )

    # Disabled masks are not DMA'd at all (not even listed in in_specs).
    in_specs = [pl.BlockSpec((None, C, tile_rows, 128),
                             lambda b, p, t, lbl, tid, cnt: (b, 0, tid[b * P + p, t], 0))]
    inputs = [logits]
    mask_spec = pl.BlockSpec((None, tile_rows, 128),
                             lambda b, p, t, lbl, tid, cnt: (b, tid[b * P + p, t], 0))
    if use_pm:
        in_specs.append(mask_spec)
        inputs.append(pm)
    if use_nm:
        in_specs.append(mask_spec)
        inputs.append(nm)

    loss_spec = pl.BlockSpec((None, loss_rows, 128),
                             lambda b, p, t, lbl, tid, cnt: (b * P + p, 0, 0))
    loss_sds = jax.ShapeDtypeStruct((B * P, loss_rows, 128), jnp.float32)
    if has_mask:
        out_shape = (loss_sds,
                     jax.ShapeDtypeStruct((B * P, cnt_rows, 128), jnp.float32))
        out_specs = (loss_spec,
                     pl.BlockSpec((None, cnt_rows, 128),
                                  lambda b, p, t, lbl, tid, cnt: (b * P + p, 0, 0)))
    else:
        out_shape = loss_sds
        out_specs = loss_spec

    result = pl.pallas_call(
        kernel,
        out_shape=out_shape,
        grid_spec=pltpu.PrefetchScalarGridSpec(
            num_scalar_prefetch=3,                # label, tile schedule, tile counts
            grid=(B, P, n_inner),
            in_specs=in_specs,
            out_specs=out_specs,
        ),
        compiler_params=pltpu.CompilerParams(
            dimension_semantics=("parallel", "parallel", "arbitrary"),
            vmem_limit_bytes=vmem_limit),
    )(lbl, tile_ids, tile_cnt, *inputs)

    # Tiny XLA epilogue: single cross-lane reduce + divide.
    # NOTE: empty valid region -> 0/0 = NaN (matches torch mean over empty gather).
    if has_mask:
        loss_parts, cnt_parts = result
        total_cnt = jnp.sum(cnt_parts) * float(C)
    else:
        loss_parts = result
        total_cnt = jnp.float32(B * HW * C)       # analytic count, no mask traffic
    total_loss = jnp.sum(loss_parts)
    return total_loss / total_cnt


def _reference_loss_np(cancer_logits, prostate_mask, needle_mask, label, pos_weight):
    """Host reference mimicking the PyTorch gather-then-BCE semantics."""
    logits = np.asarray(cancer_logits, np.float64)
    pm = np.asarray(prostate_mask) > 0.5
    nm = np.asarray(needle_mask) > 0.5
    mask = pm & nm                                       # (B,1,H,W)
    B, C, H, W = logits.shape
    preds, labs = [], []
    for b in range(B):
        m = mask[b, 0]                                   # (H, W)
        sel = logits[b].transpose(1, 2, 0)[m]            # (N_b, C)
        preds.append(sel)
        labs.append(np.full((sel.shape[0], 1), float(label[b])))
    x = np.concatenate(preds, axis=0)                    # (N, C)
    y = np.concatenate(labs, axis=0)                     # (N, 1) -> broadcast (N, C)
    sp = np.logaddexp(0.0, -x)
    loss = (1.0 - y) * x + (1.0 + (pos_weight - 1.0) * y) * sp
    return loss.mean()


if __name__ == "__main__":
    # Module config (deterministic, in-script): base_loss='ce', pos_weight=2.0,
    # both prostate and needle masks enabled.
    LOSS_POS_WEIGHT = 2.0

    B, C, H, W = 2, 1, 64, 64
    key = jax.random.PRNGKey(0)
    k1, k2, k3, k4, k5 = jax.random.split(key, 5)

    cancer_logits = jax.random.normal(k1, (B, C, H, W), dtype=jnp.float32)
    prostate_mask = jax.random.uniform(k2, (B, 1, H, W), dtype=jnp.float32)
    needle_mask = jax.random.uniform(k3, (B, 1, H, W), dtype=jnp.float32)
    label = jax.random.bernoulli(k4, 0.5, (B,)).astype(jnp.float32)
    involvement = jax.random.uniform(k5, (B,), dtype=jnp.float32)  # unused by 'ce'

    loss = cancer_detection_valid_region_loss(
        cancer_logits, prostate_mask, needle_mask, label, involvement,
        base_loss="ce", loss_pos_weight=LOSS_POS_WEIGHT,
        use_prostate_mask=True, use_needle_mask=True,
    )
    loss = jax.block_until_ready(loss)

    ref = _reference_loss_np(cancer_logits, prostate_mask, needle_mask, label,
                             LOSS_POS_WEIGHT)
    np.testing.assert_allclose(np.asarray(loss), ref, rtol=1e-5, atol=1e-5)

    # Low-traffic mask interface: uint8 masks (4x fewer mask bytes) give
    # identical results.
    pm_u8 = (prostate_mask > 0.5).astype(jnp.uint8)
    nm_u8 = (needle_mask > 0.5).astype(jnp.uint8)
    loss_u8 = jax.block_until_ready(cancer_detection_valid_region_loss(
        cancer_logits, pm_u8, nm_u8, label, involvement,
        base_loss="ce", loss_pos_weight=LOSS_POS_WEIGHT,
        use_prostate_mask=True, use_needle_mask=True,
    ))
    np.testing.assert_allclose(np.asarray(loss_u8), ref, rtol=1e-5, atol=1e-5)

    print("KERNEL_OK")
</pallas_src>

<mosaic_0001>
module attributes {stable_mosaic.version = 11 : i64} {
  func.func @_valid_region_ce_kernel(%arg0: i32, %arg1: i32, %arg2: i32, %arg3: memref<2xf32, #tpu.memory_space<smem>>, %arg4: memref<4x1xi32, #tpu.memory_space<smem>>, %arg5: memref<4xi32, #tpu.memory_space<smem>>, %arg6: memref<1x1x16x128xf32, #tpu.memory_space<vmem>>, %arg7: memref<1x16x128xf32, #tpu.memory_space<vmem>>, %arg8: memref<1x16x128xf32, #tpu.memory_space<vmem>>, %arg9: memref<1x8x128xf32, #tpu.memory_space<vmem>>, %arg10: memref<1x8x128xf32, #tpu.memory_space<vmem>>) attributes {dimension_semantics = [#tpu.dimension_semantics<parallel>, #tpu.dimension_semantics<parallel>, #tpu.dimension_semantics<arbitrary>], iteration_bounds = array<i64: 2, 2, 1>, scalar_prefetch = 3 : i64, scratch_operands = 0 : i64, tpu.core_type = #tpu.core_type<tc>, window_params = [{transform_indices = @transform_0, window_bounds = array<i64: 1, 1, 16, 128>}, {transform_indices = @transform_1, window_bounds = array<i64: 1, 16, 128>}, {transform_indices = @transform_2, window_bounds = array<i64: 1, 16, 128>}, {transform_indices = @transform_3, window_bounds = array<i64: 1, 8, 128>}, {transform_indices = @transform_4, window_bounds = array<i64: 1, 8, 128>}]} {
    %c2_i32 = arith.constant 2 : i32
    %0 = arith.muli %arg0, %c2_i32 : i32
    %1 = arith.addi %0, %arg1 : i32
    %c0_i32 = arith.constant 0 : i32
    %2 = arith.cmpi eq, %arg2, %c0_i32 : i32
    %3 = arith.extui %2 : i1 to i32
    %c0_i32_0 = arith.constant 0 : i32
    %4 = arith.cmpi ne, %3, %c0_i32_0 : i32
    scf.if %4 {
      %cst = arith.constant 0.000000e+00 : f32
      %10 = vector.broadcast %cst : f32 to vector<8x128xf32>
      %c0 = arith.constant 0 : index
      %c0_2 = arith.constant 0 : index
      %c0_3 = arith.constant 0 : index
      %11 = vector.load %arg9[%c0, %c0_2, %c0_3] : memref<1x8x128xf32, #tpu.memory_space<vmem>>, vector<1x8x128xf32>
      %12 = vector.shape_cast %11 : vector<1x8x128xf32> to vector<8x128xf32>
      %13 = vector.shape_cast %10 : vector<8x128xf32> to vector<1x8x128xf32>
      tpu.vector_store %arg9[%c0, %c0_2, %c0_3], %13 {strides = array<i32>} : memref<1x8x128xf32, #tpu.memory_space<vmem>>, vector<1x8x128xf32>,
      %cst_4 = arith.constant 0.000000e+00 : f32
      %14 = vector.broadcast %cst_4 : f32 to vector<8x128xf32>
      %c0_5 = arith.constant 0 : index
      %c0_6 = arith.constant 0 : index
      %c0_7 = arith.constant 0 : index
      %15 = vector.load %arg10[%c0_5, %c0_6, %c0_7] : memref<1x8x128xf32, #tpu.memory_space<vmem>>, vector<1x8x128xf32>
      %16 = vector.shape_cast %15 : vector<1x8x128xf32> to vector<8x128xf32>
      %17 = vector.shape_cast %14 : vector<8x128xf32> to vector<1x8x128xf32>
      tpu.vector_store %arg10[%c0_5, %c0_6, %c0_7], %17 {strides = array<i32>} : memref<1x8x128xf32, #tpu.memory_space<vmem>>, vector<1x8x128xf32>,
    } else {
    }
    %5 = arith.index_cast %1 : i32 to index
    %6 = memref.load %arg5[%5] : memref<4xi32, #tpu.memory_space<smem>>
    %7 = arith.cmpi slt, %arg2, %6 : i32
    %8 = arith.extui %7 : i1 to i32
    %c0_i32_1 = arith.constant 0 : i32
    %9 = arith.cmpi ne, %8, %c0_i32_1 : i32
    scf.if %9 {
      %c0 = arith.constant 0 : index
      %c0_2 = arith.constant 0 : index
      %c0_3 = arith.constant 0 : index
      %c0_4 = arith.constant 0 : index
      %10 = vector.load %arg6[%c0, %c0_2, %c0_3, %c0_4] : memref<1x1x16x128xf32, #tpu.memory_space<vmem>>, vector<1x1x16x128xf32>
      %11 = vector.shape_cast %10 : vector<1x1x16x128xf32> to vector<1x16x128xf32>
      %c0_5 = arith.constant 0 : index
      %c0_6 = arith.constant 0 : index
      %c0_7 = arith.constant 0 : index
      %12 = vector.load %arg7[%c0_5, %c0_6, %c0_7] : memref<1x16x128xf32, #tpu.memory_space<vmem>>, vector<1x16x128xf32>
      %13 = vector.shape_cast %12 : vector<1x16x128xf32> to vector<16x128xf32>
      %cst = arith.constant 5.000000e-01 : f32
      %14 = vector.broadcast %cst : f32 to vector<16x128xf32>
      %15 = arith.cmpf ogt, %13, %14 : vector<16x128xf32>
      %c0_8 = arith.constant 0 : index
      %c0_9 = arith.constant 0 : index
      %c0_10 = arith.constant 0 : index
      %16 = vector.load %arg8[%c0_8, %c0_9, %c0_10] : memref<1x16x128xf32, #tpu.memory_space<vmem>>, vector<1x16x128xf32>
      %17 = vector.shape_cast %16 : vector<1x16x128xf32> to vector<16x128xf32>
      %cst_11 = arith.constant 5.000000e-01 : f32
      %18 = vector.broadcast %cst_11 : f32 to vector<16x128xf32>
      %19 = arith.cmpf ogt, %17, %18 : vector<16x128xf32>
      %20 = arith.andi %15, %19 : vector<16x128xi1>
      %21 = arith.index_cast %arg0 : i32 to index
      %22 = memref.load %arg3[%21] : memref<2xf32, #tpu.memory_space<smem>>
      %cst_12 = arith.constant 1.000000e+00 : f32
      %23 = arith.subf %cst_12, %22 : f32
      %cst_13 = arith.constant 1.000000e+00 : f32
      %24 = arith.mulf %cst_13, %22 : f32
      %cst_14 = arith.constant 1.000000e+00 : f32
      %25 = arith.addf %cst_14, %24 : f32
      %cst_15 = arith.constant 0.000000e+00 : f32
      %26 = vector.broadcast %cst_15 : f32 to vector<1x16x128xf32>
      %27 = arith.subf %26, %11 : vector<1x16x128xf32>
      %cst_16 = arith.constant 0.000000e+00 : f32
      %28 = vector.broadcast %cst_16 : f32 to vector<1x16x128xf32>
      %29 = arith.maximumf %27, %28 : vector<1x16x128xf32>
      %30 = math.absf %11 : vector<1x16x128xf32>
      %cst_17 = arith.constant 0.000000e+00 : f32
      %31 = vector.broadcast %cst_17 : f32 to vector<1x16x128xf32>
      %32 = arith.subf %31, %30 : vector<1x16x128xf32>
      %33 = math.exp %32 : vector<1x16x128xf32>
      %34 = math.log1p %33 : vector<1x16x128xf32>
      %35 = arith.addf %29, %34 : vector<1x16x128xf32>
      %36 = vector.broadcast %23 : f32 to vector<1x16x128xf32>
      %37 = arith.mulf %36, %11 : vector<1x16x128xf32>
      %38 = vector.broadcast %25 : f32 to vector<1x16x128xf32>
      %39 = arith.mulf %38, %35 : vector<1x16x128xf32>
      %40 = arith.addf %37, %39 : vector<1x16x128xf32>
      %41 = vector.shape_cast %20 : vector<16x128xi1> to vector<1x16x128xi1>
      %cst_18 = arith.constant 0.000000e+00 : f32
      %42 = vector.broadcast %cst_18 : f32 to vector<1x16x128xf32>
      %43 = arith.select %41, %40, %42 : vector<1x16x128xi1>, vector<1x16x128xf32>
      %c0_19 = arith.constant 0 : index
      %c0_20 = arith.constant 0 : index
      %c0_21 = arith.constant 0 : index
      %44 = vector.load %arg9[%c0_19, %c0_20, %c0_21] : memref<1x8x128xf32, #tpu.memory_space<vmem>>, vector<1x8x128xf32>
      %45 = vector.shape_cast %44 : vector<1x8x128xf32> to vector<8x128xf32>
      %46 = vector.shape_cast %43 : vector<1x16x128xf32> to vector<16x128xf32>
      %47 = vector.shape_cast %46 : vector<16x128xf32> to vector<2x8x128xf32>
      %cst_22 = arith.constant dense<0.000000e+00> : vector<8x128xf32>
      %48 = vector.multi_reduction <add>, %47, %cst_22 [0] : vector<2x8x128xf32> to vector<8x128xf32>
      %49 = arith.addf %45, %48 : vector<8x128xf32>
      %c0_23 = arith.constant 0 : index
      %c0_24 = arith.constant 0 : index
      %c0_25 = arith.constant 0 : index
      %50 = vector.load %arg9[%c0_23, %c0_24, %c0_25] : memref<1x8x128xf32, #tpu.memory_space<vmem>>, vector<1x8x128xf32>
      %51 = vector.shape_cast %50 : vector<1x8x128xf32> to vector<8x128xf32>
      %52 = vector.shape_cast %49 : vector<8x128xf32> to vector<1x8x128xf32>
      tpu.vector_store %arg9[%c0_23, %c0_24, %c0_25], %52 {strides = array<i32>} : memref<1x8x128xf32, #tpu.memory_space<vmem>>, vector<1x8x128xf32>,
      %c0_26 = arith.constant 0 : index
      %c0_27 = arith.constant 0 : index
      %c0_28 = arith.constant 0 : index
      %53 = vector.load %arg10[%c0_26, %c0_27, %c0_28] : memref<1x8x128xf32, #tpu.memory_space<vmem>>, vector<1x8x128xf32>
      %54 = vector.shape_cast %53 : vector<1x8x128xf32> to vector<8x128xf32>
      %55 = arith.extui %20 : vector<16x128xi1> to vector<16x128xi32>
      %56 = arith.sitofp %55 : vector<16x128xi32> to vector<16x128xf32>
      %57 = vector.shape_cast %56 : vector<16x128xf32> to vector<2x8x128xf32>
      %cst_29 = arith.constant dense<0.000000e+00> : vector<8x128xf32>
      %58 = vector.multi_reduction <add>, %57, %cst_29 [0] : vector<2x8x128xf32> to vector<8x128xf32>
      %59 = arith.addf %54, %58 : vector<8x128xf32>
      %c0_30 = arith.constant 0 : index
      %c0_31 = arith.constant 0 : index
      %c0_32 = arith.constant 0 : index
      %60 = vector.load %arg10[%c0_30, %c0_31, %c0_32] : memref<1x8x128xf32, #tpu.memory_space<vmem>>, vector<1x8x128xf32>
      %61 = vector.shape_cast %60 : vector<1x8x128xf32> to vector<8x128xf32>
      %62 = vector.shape_cast %59 : vector<8x128xf32> to vector<1x8x128xf32>
      tpu.vector_store %arg10[%c0_30, %c0_31, %c0_32], %62 {strides = array<i32>} : memref<1x8x128xf32, #tpu.memory_space<vmem>>, vector<1x8x128xf32>,
    } else {
    }
    return
  }
  func.func @transform_0(%arg0: i32, %arg1: i32, %arg2: i32, %arg3: memref<2xf32, #tpu.memory_space<smem>>, %arg4: memref<4x1xi32, #tpu.memory_space<smem>>, %arg5: memref<4xi32, #tpu.memory_space<smem>>) -> (i32, i32, i32, i32) {
    %c2_i32 = arith.constant 2 : i32
    %0 = arith.muli %arg0, %c2_i32 : i32
    %1 = arith.addi %0, %arg1 : i32
    %2 = arith.index_cast %1 : i32 to index
    %3 = arith.index_cast %arg2 : i32 to index
    %4 = memref.load %arg4[%2, %3] : memref<4x1xi32, #tpu.memory_space<smem>>
    %c0_i32 = arith.constant 0 : i32
    %c0_i32_0 = arith.constant 0 : i32
    %c0_i32_1 = arith.constant 0 : i32
    return %arg0, %c0_i32, %4, %c0_i32_0 : i32, i32, i32, i32
  }
  func.func @transform_1(%arg0: i32, %arg1: i32, %arg2: i32, %arg3: memref<2xf32, #tpu.memory_space<smem>>, %arg4: memref<4x1xi32, #tpu.memory_space<smem>>, %arg5: memref<4xi32, #tpu.memory_space<smem>>) -> (i32, i32, i32) {
    %c2_i32 = arith.constant 2 : i32
    %0 = arith.muli %arg0, %c2_i32 : i32
    %1 = arith.addi %0, %arg1 : i32
    %2 = arith.index_cast %1 : i32 to index
    %3 = arith.index_cast %arg2 : i32 to index
    %4 = memref.load %arg4[%2, %3] : memref<4x1xi32, #tpu.memory_space<smem>>
    %c0_i32 = arith.constant 0 : i32
    %c0_i32_0 = arith.constant 0 : i32
    return %arg0, %4, %c0_i32 : i32, i32, i32
  }
  func.func @transform_2(%arg0: i32, %arg1: i32, %arg2: i32, %arg3: memref<2xf32, #tpu.memory_space<smem>>, %arg4: memref<4x1xi32, #tpu.memory_space<smem>>, %arg5: memref<4xi32, #tpu.memory_space<smem>>) -> (i32, i32, i32) {
    %c2_i32 = arith.constant 2 : i32
    %0 = arith.muli %arg0, %c2_i32 : i32
    %1 = arith.addi %0, %arg1 : i32
    %2 = arith.index_cast %1 : i32 to index
    %3 = arith.index_cast %arg2 : i32 to index
    %4 = memref.load %arg4[%2, %3] : memref<4x1xi32, #tpu.memory_space<smem>>
    %c0_i32 = arith.constant 0 : i32
    %c0_i32_0 = arith.constant 0 : i32
    return %arg0, %4, %c0_i32 : i32, i32, i32
  }
  func.func @transform_3(%arg0: i32, %arg1: i32, %arg2: i32, %arg3: memref<2xf32, #tpu.memory_space<smem>>, %arg4: memref<4x1xi32, #tpu.memory_space<smem>>, %arg5: memref<4xi32, #tpu.memory_space<smem>>) -> (i32, i32, i32) {
    %c2_i32 = arith.constant 2 : i32
    %0 = arith.muli %arg0, %c2_i32 : i32
    %1 = arith.addi %0, %arg1 : i32
    %c0_i32 = arith.constant 0 : i32
    %c0_i32_0 = arith.constant 0 : i32
    %c0_i32_1 = arith.constant 0 : i32
    return %1, %c0_i32, %c0_i32_0 : i32, i32, i32
  }
  func.func @transform_4(%arg0: i32, %arg1: i32, %arg2: i32, %arg3: memref<2xf32, #tpu.memory_space<smem>>, %arg4: memref<4x1xi32, #tpu.memory_space<smem>>, %arg5: memref<4xi32, #tpu.memory_space<smem>>) -> (i32, i32, i32) {
    %c2_i32 = arith.constant 2 : i32
    %0 = arith.muli %arg0, %c2_i32 : i32
    %1 = arith.addi %0, %arg1 : i32
    %c0_i32 = arith.constant 0 : i32
    %c0_i32_0 = arith.constant 0 : i32
    %c0_i32_1 = arith.constant 0 : i32
    return %1, %c0_i32, %c0_i32_0 : i32, i32, i32
  }
}

</mosaic_0001>

<llo_original>
// kernel: tpu_custom_call.1
$region0: #{tpu_custom_call.1}
  #allocation0 [shape = 'u32[]', space=smem, size = 0x4, offset = 0x4, fixed_abs, tag = 'smem constant byte address 0x4 - core index']
  #allocation1 [shape = 'u32[144,128]{1,0:T(1,128)}', space=vmem, size = 0x12000, scoped, tag = 'internal scratch']
  #allocation2 [shape = 's32[1]{0}', space=sflag, size = 0x4, scoped, tag = 'scoped memory for tpu_custom_call.1']
  #allocation3 [shape = 'u8[512]{0}', space=smem, size = 0x200, scoped, tag = 'prefetched SMEM operand 0']
  #allocation4 [shape = 'u8[2048]{0}', space=smem, size = 0x800, scoped, tag = 'prefetched SMEM operand 1']
  #allocation5 [shape = 'u8[512]{0}', space=smem, size = 0x200, scoped, tag = 'prefetched SMEM operand 2']
  %s0 = inlined_call_operand.vmem [shape: f32[2], index: 0, kind: input, shape index: {}]
  %s1 = inlined_call_operand.vmem [shape: s32[4,1], index: 1, kind: input, shape index: {}]
  %s2 = inlined_call_operand.vmem [shape: s32[4], index: 2, kind: input, shape index: {}]
  %s3 = inlined_call_operand.hbm [shape: f32[2,1,32,128], index: 3, kind: input, shape index: {}]
  %s4 = inlined_call_operand.hbm [shape: f32[2,32,128], index: 4, kind: input, shape index: {}]
  %s5 = inlined_call_operand.hbm [shape: f32[2,32,128], index: 5, kind: input, shape index: {}]
  %s6 = inlined_call_operand.hbm [shape: f32[4,8,128], index: 6, kind: output, shape index: {0}]
  %s7 = inlined_call_operand.hbm [shape: f32[4,8,128], index: 7, kind: output, shape index: {1}]
  %8 = xla_tuple %s6, %s7
  %s9 = sld [smem:[#allocation0]]
  $region73: #{tpu_custom_call.1} parent=0
    _
  %s11 = ssub.s32 1, %s9
  %s12 = scalar_select 0, %s11, %s9
  %s13 = sshll.u32 %s0, 4
  %s14 = int_to_ptr.vmem [resolvable:$true] %s13
  %16 = dma.vmem_to_smem %s14, 16, [#allocation3], [#allocation2]
  %s17 = sshll.u32 %s1, 4
  %s18 = int_to_ptr.vmem [resolvable:$true] %s17
  %20 = dma.vmem_to_smem %s18, 64, [#allocation4], [#allocation2]
  %s21 = sshll.u32 %s2, 4
  %s22 = int_to_ptr.vmem [resolvable:$true] %s21
  %24 = dma.vmem_to_smem %s22, 16, [#allocation5], [#allocation2]
  %25 = dma.done [#allocation2], 96
  %26 = sfence
  $region1: #{tpu_custom_call.1} parent=0
    #allocation6 [shape = 'u8[16384]{0}', space=vmem, size = 0x4000, scoped, tag = 'input window, operand 3']
    #allocation7 [shape = 's32[2]{0}', space=sflag, size = 0x8, scoped, tag = 'scoped memory for tpu_custom_call.1']
    #allocation8 [shape = 's32[2]{0}', space=sflag, size = 0x8, scoped, tag = 'scoped memory for tpu_custom_call.1']
    #allocation9 [shape = 'u8[16384]{0}', space=vmem, size = 0x4000, scoped, tag = 'input window, operand 4']
    #allocation10 [shape = 's32[2]{0}', space=sflag, size = 0x8, scoped, tag = 'scoped memory for tpu_custom_call.1']
    #allocation11 [shape = 'u8[16384]{0}', space=vmem, size = 0x4000, scoped, tag = 'input window, operand 5']
    #allocation12 [shape = 'u8[8192]{0}', space=vmem, size = 0x2000, scoped, tag = 'output window, operand 0']
    #allocation13 [shape = 'u8[8192]{0}', space=vmem, size = 0x2000, scoped, tag = 'output window, operand 1']
    #allocation14 [shape = 's32[2]{0}', space=sflag, size = 0x8, scoped, tag = 'scoped memory for tpu_custom_call.1']
    %27 = vsyncpa [#allocation7], 0
    %s28 = scalar_lea.sflag [#allocation7], 1
    %29 = vsyncpa %s28, 0
    %30 = vsyncpa [#allocation10], 0
    %s31 = scalar_lea.sflag [#allocation10], 1
    %32 = vsyncpa %s31, 0
    %33 = vsyncpa [#allocation8], 0
    %s34 = scalar_lea.sflag [#allocation8], 1
    %35 = vsyncpa %s34, 0
    %36 = vsyncpa [#allocation14], 0
    %s37 = scalar_lea.sflag [#allocation14], 1
    %38 = vsyncpa %s37, 0
    loop: start=0, step=1, limit=6
    $region2: #{tpu_custom_call.1} parent=1 // loop_pre_header
      _
    $region3: #{tpu_custom_call.1} parent=1 // loop_header
      %s40 = sphi 0, %s44
      %p41 = scmp.ge.s32.totalorder %s40, 6
      %s47 = sphi 0, %s66
      %s48 = sphi 0, %s62
      %s49 = sphi 0, %s58
      %s50 = sphi 0, %s47
      %s51 = sphi 0, %s48
      %s52 = sphi 0, %s49
      %s53 = sphi 0, %s50
      %s54 = sphi 0, %s51
      %s55 = sphi 0, %s52
      %s91 = sphi 0, %s93
      %s94 = sphi 0, %s91
      %s95 = sphi 0, %s94
      %s111 = sphi 0, %s95
      %s139 = sphi 0, %s141
      %s142 = sphi 0, %s139
      %s143 = sphi 0, %s142
      %s159 = sphi 0, %s143
      %s187 = sphi 0, %s189
      %s190 = sphi 0, %s187
      %s191 = sphi 0, %s190
      %s207 = sphi 0, %s191
      %s217 = sphi 0, %s219
      %s220 = sphi 0, %s217
      %s221 = sphi 0, %s220
      %s237 = sphi 0, %s221
      %s247 = sphi 0, %s249
      %s250 = sphi 0, %s247
      %s251 = sphi 0, %s250
      %s267 = sphi 0, %s251
    $region4: #{tpu_custom_call.1} parent=1 // loop_header_branch
      %43 = sbr.rel (%p41) target = $region8
    $region5: #{tpu_custom_call.1} parent=1 // loop_body
      %s45 = ssub.s32 %s40, 1
      %s46 = ssub.s32 %s40, 2
      %s56 = sadd.s32 1, %s49
      %p57 = scmp.ge.s32.totalorder %s56, 1
      %s58 = scalar_select %p57, 0, %s56
      %s59 = sadd.s32 1, %s48
      %s60 = scalar_select %p57, %s59, %s48
      %p61 = scmp.ge.s32.totalorder %s60, 2
      %s62 = scalar_select %p61, 0, %s60
      %s63 = sadd.s32 1, %s47
      %s64 = scalar_select %p61, %s63, %s47
      %p65 = scmp.ge.s32.totalorder %s64, 2
      %s66 = scalar_select %p65, 0, %s64
      %s67 = smul.u32 %s47, 2
      %s68 = sadd.s32 %s67, %s48
      %s69 = sshra.s32 %s49, 7
      %s70 = sand.u32 %s49, 127
      %s71 = sadd.s32 %s69, %s68
      %s72 = smul.u32 %s71, 128
      %s73 = sshra.s32 %s49, 7
      %s74 = sand.u32 %s49, 127
      %s75 = sadd.s32 %s72, %s74
      %s76 = sld [smem:[#allocation4 + %s75]]
      %s77 = smul.u32 %s66, 2
      %s78 = sadd.s32 %s77, %s62
      %s79 = sshra.s32 %s58, 7
      %s80 = sand.u32 %s58, 127
      %s81 = sadd.s32 %s79, %s78
      %s82 = smul.u32 %s81, 128
      %s83 = sshra.s32 %s58, 7
      %s84 = sand.u32 %s58, 127
      %s85 = sadd.s32 %s82, %s84
      %s86 = sld [smem:[#allocation4 + %s85]]
      %s87 = ssub.s32 %s47, %s66
      %s88 = ssub.s32 %s76, %s86
      %s89 = sor.u32 %s87, %s88
      %p90 = scmp.eq.s32.totalorder %s89, 0
      %s92 = sadd.s32 %s91, 1
      %s93 = scalar_select %p90, %s91, %s92
      %p96 = pneg %p90
      %p97 = scmp.eq.s32.totalorder %s40, 3
      %p98 = por %p96, %p97
      %p99 = scmp.ne.s32.totalorder %s91, %s94
      %p100 = scmp.eq.s32.totalorder %s40, 0
      %p101 = por %p99, %p100
      %p102 = scmp.ne.s32.totalorder %s91, %s94
      %p103 = scmp.eq.s32.totalorder %s45, 3
      %p104 = por %p102, %p103
      %p105 = scmp.ne.s32.totalorder %s94, %s95
      %p106 = scmp.eq.s32.totalorder %s45, 0
      %p107 = por %p105, %p106
      %p108 = scmp.ne.s32.totalorder %s94, %s95
      %p109 = scmp.eq.s32.totalorder %s46, 3
      %p110 = por %p108, %p109
      %p112 = scmp.ne.s32.totalorder %s95, %s111
      %p113 = scmp.eq.s32.totalorder %s46, 0
      %p114 = por %p112, %p113
      %s115 = smul.u32 %s47, 2
      %s116 = sadd.s32 %s115, %s48
      %s117 = sshra.s32 %s49, 7
      %s118 = sand.u32 %s49, 127
      %s119 = sadd.s32 %s117, %s116
      %s120 = smul.u32 %s119, 128
      %s121 = sshra.s32 %s49, 7
      %s122 = sand.u32 %s49, 127
      %s123 = sadd.s32 %s120, %s122
      %s124 = sld [smem:[#allocation4 + %s123]]
      %s125 = smul.u32 %s66, 2
      %s126 = sadd.s32 %s125, %s62
      %s127 = sshra.s32 %s58, 7
      %s128 = sand.u32 %s58, 127
      %s129 = sadd.s32 %s127, %s126
      %s130 = smul.u32 %s129, 128
      %s131 = sshra.s32 %s58, 7
      %s132 = sand.u32 %s58, 127
      %s133 = sadd.s32 %s130, %s132
      %s134 = sld [smem:[#allocation4 + %s133]]
      %s135 = ssub.s32 %s47, %s66
      %s136 = ssub.s32 %s124, %s134
      %s137 = sor.u32 %s135, %s136
      %p138 = scmp.eq.s32.totalorder %s137, 0
      %s140 = sadd.s32 %s139, 1
      %s141 = scalar_select %p138, %s139, %s140
      %p144 = pneg %p138
      %p145 = scmp.eq.s32.totalorder %s40, 3
      %p146 = por %p144, %p145
      %p147 = scmp.ne.s32.totalorder %s139, %s142
      %p148 = scmp.eq.s32.totalorder %s40, 0
      %p149 = por %p147, %p148
      %p150 = scmp.ne.s32.totalorder %s139, %s142
      %p151 = scmp.eq.s32.totalorder %s45, 3
      %p152 = por %p150, %p151
      %p153 = scmp.ne.s32.totalorder %s142, %s143
      %p154 = scmp.eq.s32.totalorder %s45, 0
      %p155 = por %p153, %p154
      %p156 = scmp.ne.s32.totalorder %s142, %s143
      %p157 = scmp.eq.s32.totalorder %s46, 3
      %p158 = por %p156, %p157
      %p160 = scmp.ne.s32.totalorder %s143, %s159
      %p161 = scmp.eq.s32.totalorder %s46, 0
      %p162 = por %p160, %p161
      %s163 = smul.u32 %s47, 2
      %s164 = sadd.s32 %s163, %s48
      %s165 = sshra.s32 %s49, 7
      %s166 = sand.u32 %s49, 127
      %s167 = sadd.s32 %s165, %s164
      %s168 = smul.u32 %s167, 128
      %s169 = sshra.s32 %s49, 7
      %s170 = sand.u32 %s49, 127
      %s171 = sadd.s32 %s168, %s170
      %s172 = sld [smem:[#allocation4 + %s171]]
      %s173 = smul.u32 %s66, 2
      %s174 = sadd.s32 %s173, %s62
      %s175 = sshra.s32 %s58, 7
      %s176 = sand.u32 %s58, 127
      %s177 = sadd.s32 %s175, %s174
      %s178 = smul.u32 %s177, 128
      %s179 = sshra.s32 %s58, 7
      %s180 = sand.u32 %s58, 127
      %s181 = sadd.s32 %s178, %s180
      %s182 = sld [smem:[#allocation4 + %s181]]
      %s183 = ssub.s32 %s47, %s66
      %s184 = ssub.s32 %s172, %s182
      %s185 = sor.u32 %s183, %s184
      %p186 = scmp.eq.s32.totalorder %s185, 0
      %s188 = sadd.s32 %s187, 1
      %s189 = scalar_select %p186, %s187, %s188
      %p192 = pneg %p186
      %p193 = scmp.eq.s32.totalorder %s40, 3
      %p194 = por %p192, %p193
      %p195 = scmp.ne.s32.totalorder %s187, %s190
      %p196 = scmp.eq.s32.totalorder %s40, 0
      %p197 = por %p195, %p196
      %p198 = scmp.ne.s32.totalorder %s187, %s190
      %p199 = scmp.eq.s32.totalorder %s45, 3
      %p200 = por %p198, %p199
      %p201 = scmp.ne.s32.totalorder %s190, %s191
      %p202 = scmp.eq.s32.totalorder %s45, 0
      %p203 = por %p201, %p202
      %p204 = scmp.ne.s32.totalorder %s190, %s191
      %p205 = scmp.eq.s32.totalorder %s46, 3
      %p206 = por %p204, %p205
      %p208 = scmp.ne.s32.totalorder %s191, %s207
      %p209 = scmp.eq.s32.totalorder %s46, 0
      %p210 = por %p208, %p209
      %s211 = smul.u32 %s47, 2
      %s212 = sadd.s32 %s211, %s48
      %s213 = smul.u32 %s66, 2
      %s214 = sadd.s32 %s213, %s62
      %s215 = ssub.s32 %s212, %s214
      %p216 = scmp.eq.s32.totalorder %s215, 0
      %s218 = sadd.s32 %s217, 1
      %s219 = scalar_select %p216, %s217, %s218
      %p222 = pneg %p216
      %p223 = scmp.eq.s32.totalorder %s40, 3
      %p224 = por %p222, %p223
      %p225 = scmp.ne.s32.totalorder %s217, %s220
      %p226 = scmp.eq.s32.totalorder %s40, 0
      %p227 = por %p225, %p226
      %p228 = scmp.ne.s32.totalorder %s217, %s220
      %p229 = scmp.eq.s32.totalorder %s45, 3
      %p230 = por %p228, %p229
      %p231 = scmp.ne.s32.totalorder %s220, %s221
      %p232 = scmp.eq.s32.totalorder %s45, 0
      %p233 = por %p231, %p232
      %p234 = scmp.ne.s32.totalorder %s220, %s221
      %p235 = scmp.eq.s32.totalorder %s46, 3
      %p236 = por %p234, %p235
      %p238 = scmp.ne.s32.totalorder %s221, %s237
      %p239 = scmp.eq.s32.totalorder %s46, 0
      %p240 = por %p238, %p239
      %s241 = smul.u32 %s47, 2
      %s242 = sadd.s32 %s241, %s48
      %s243 = smul.u32 %s66, 2
      %s244 = sadd.s32 %s243, %s62
      %s245 = ssub.s32 %s242, %s244
      %p246 = scmp.eq.s32.totalorder %s245, 0
      %s248 = sadd.s32 %s247, 1
      %s249 = scalar_select %p246, %s247, %s248
      %p252 = pneg %p246
      %p253 = scmp.eq.s32.totalorder %s40, 3
      %p254 = por %p252, %p253
      %p255 = scmp.ne.s32.totalorder %s247, %s250
      %p256 = scmp.eq.s32.totalorder %s40, 0
      %p257 = por %p255, %p256
      %p258 = scmp.ne.s32.totalorder %s247, %s250
      %p259 = scmp.eq.s32.totalorder %s45, 3
      %p260 = por %p258, %p259
      %p261 = scmp.ne.s32.totalorder %s250, %s251
      %p262 = scmp.eq.s32.totalorder %s45, 0
      %p263 = por %p261, %p262
      %p264 = scmp.ne.s32.totalorder %s250, %s251
      %p265 = scmp.eq.s32.totalorder %s46, 3
      %p266 = por %p264, %p265
      %p268 = scmp.ne.s32.totalorder %s251, %s267
      %p269 = scmp.eq.s32.totalorder %s46, 0
      %p270 = por %p268, %p269
      %p271 = scmp.le.s32.totalorder 1, %s40
      %p272 = scmp.lt.s32.totalorder %s40, 5
      %p273 = pnand %p271, %p272
      %p274 = pneg %p273
      // Predicated region
      $region9: #{tpu_custom_call.1} parent=5 // pred_check
        _
      $region10: #{tpu_custom_call.1} parent=5 // pred_check_branch
        %276 = sbr.rel (%p273) target = $region12
      $region11: #{tpu_custom_call.1} parent=5 // pred_region
        %s277 = ssub.s32 %s40, 1
      $region12: #{tpu_custom_call.1} parent=5 // pred_fallthru
        _
      %p278 = scmp.lt.s32.totalorder %s40, 4
      // Predicated region
      $region13: #{tpu_custom_call.1} parent=5 // pred_check
        %p279 = pneg %p278
      $region14: #{tpu_custom_call.1} parent=5 // pred_check_branch
        %281 = sbr.rel (%p279) target = $region16
      $region15: #{tpu_custom_call.1} parent=5 // pred_region
        // Predicated region
        $region17: #{tpu_custom_call.1} parent=15 // pred_check
          %p282 = pneg %p101
        $region18: #{tpu_custom_call.1} parent=15 // pred_check_branch
          %284 = sbr.rel (%p282) target = $region20
        $region19: #{tpu_custom_call.1} parent=15 // pred_region
          %s285 = sand.u32 %s91, 1
          %s286 = scalar_lea.sflag [#allocation7], %s285
          %s287 = sand.u32 %s91, 1
          %s288 = smul.addr %s287, 16
          %s289 = scalar_lea.vmem [#allocation6], %s288
          %s290 = smul.u32 %s47, 2
          %s291 = sadd.s32 %s290, %s48
          %s292 = sshra.s32 %s49, 7
          %s293 = sand.u32 %s49, 127
          %s294 = sadd.s32 %s292, %s291
          %s295 = smul.u32 %s294, 128
          %s296 = sshra.s32 %s49, 7
          %s297 = sand.u32 %s49, 127
          %s298 = sadd.s32 %s295, %s297
          %s299 = sld [smem:[#allocation4 + %s298]]
          %s300 = smul.u32 2, %s299
          %s302 = ssub.s32 256, 256
          %303 = vsyncadd %s286, %s302
          %s304 = smul.addr %s47, 4
          %s305 = sadd.s32 %s300, %s304
          %s306 = smul.addr %s305, 128
          %s307 = scalar_lea.hbm %s3, %s306
          %s308 = sshll.u32 %s289, 4
          %s309 = int_to_ptr.vmem [resolvable:$true] %s308
          %314 = dma.hbm_to_vmem [thread:$0]  %s307, 256, %s309, %s286, 128, 128, 8
        $region20: #{tpu_custom_call.1} parent=15 // pred_fallthru
          _
        // Predicated region
        $region21: #{tpu_custom_call.1} parent=15 // pred_check
          %p315 = pneg %p149
        $region22: #{tpu_custom_call.1} parent=15 // pred_check_branch
          %317 = sbr.rel (%p315) target = $region24
        $region23: #{tpu_custom_call.1} parent=15 // pred_region
          %s318 = sand.u32 %s40, 1
          %s319 = scalar_lea.sflag [#allocation10], %s318
          %s320 = sand.u32 %s139, 1
          %s321 = smul.addr %s320, 16
          %s322 = scalar_lea.vmem [#allocation9], %s321
          %s323 = smul.u32 %s47, 2
          %s324 = sadd.s32 %s323, %s48
          %s325 = sshra.s32 %s49, 7
          %s326 = sand.u32 %s49, 127
          %s327 = sadd.s32 %s325, %s324
          %s328 = smul.u32 %s327, 128
          %s329 = sshra.s32 %s49, 7
          %s330 = sand.u32 %s49, 127
          %s331 = sadd.s32 %s328, %s330
          %s332 = sld [smem:[#allocation4 + %s331]]
          %s333 = smul.u32 2, %s332
          %s335 = ssub.s32 256, 256
          %336 = vsyncadd %s319, %s335
          %s337 = smul.addr %s47, 4
          %s338 = sadd.s32 %s333, %s337
          %s339 = smul.addr %s338, 128
          %s340 = scalar_lea.hbm %s4, %s339
          %s341 = sshll.u32 %s322, 4
          %s342 = int_to_ptr.vmem [resolvable:$true] %s341
          %347 = dma.hbm_to_vmem [thread:$0]  %s340, 256, %s342, %s319, 128, 128, 8
        $region24: #{tpu_custom_call.1} parent=15 // pred_fallthru
          _
        // Predicated region
        $region25: #{tpu_custom_call.1} parent=15 // pred_check
          %p348 = pneg %p197
        $region26: #{tpu_custom_call.1} parent=15 // pred_check_branch
          %350 = sbr.rel (%p348) target = $region28
        $region27: #{tpu_custom_call.1} parent=15 // pred_region
          %s351 = sand.u32 %s40, 1
          %s352 = scalar_lea.sflag [#allocation10], %s351
          %s353 = sand.u32 %s187, 1
          %s354 = smul.addr %s353, 16
          %s355 = scalar_lea.vmem [#allocation11], %s354
          %s356 = smul.u32 %s47, 2
          %s357 = sadd.s32 %s356, %s48
          %s358 = sshra.s32 %s49, 7
          %s359 = sand.u32 %s49, 127
          %s360 = sadd.s32 %s358, %s357
          %s361 = smul.u32 %s360, 128
          %s362 = sshra.s32 %s49, 7
          %s363 = sand.u32 %s49, 127
          %s364 = sadd.s32 %s361, %s363
          %s365 = sld [smem:[#allocation4 + %s364]]
          %s366 = smul.u32 2, %s365
          %s368 = ssub.s32 256, 256
          %369 = vsyncadd %s352, %s368
          %s370 = smul.addr %s47, 4
          %s371 = sadd.s32 %s366, %s370
          %s372 = smul.addr %s371, 128
          %s373 = scalar_lea.hbm %s5, %s372
          %s374 = sshll.u32 %s355, 4
          %s375 = int_to_ptr.vmem [resolvable:$true] %s374
          %380 = dma.hbm_to_vmem [thread:$0]  %s373, 256, %s375, %s352, 128, 128, 8
        $region28: #{tpu_custom_call.1} parent=15 // pred_fallthru
          _
      $region16: #{tpu_custom_call.1} parent=5 // pred_fallthru
        _
      %p381 = scmp.le.s32.totalorder 1, %s40
      %p382 = scmp.lt.s32.totalorder %s40, 5
      %p383 = pnand %p381, %p382
      %p384 = pneg %p383
      // Predicated region
      $region29: #{tpu_custom_call.1} parent=5 // pred_check
        _
      $region30: #{tpu_custom_call.1} parent=5 // pred_check_branch
        %386 = sbr.rel (%p383) target = $region32
      $region31: #{tpu_custom_call.1} parent=5 // pred_region
        %s387 = ssub.s32 %s40, 1
        %s388 = sand.u32 %s94, 1
        %s389 = scalar_lea.sflag [#allocation7], %s388
        %s390 = sand.u32 %s94, 1
        %s391 = smul.addr %s390, 16
        %s392 = scalar_lea.vmem [#allocation6], %s391
        // Predicated region
        $region33: #{tpu_custom_call.1} parent=31 // pred_check
          %p393 = pneg %p107
        $region34: #{tpu_custom_call.1} parent=31 // pred_check_branch
          %395 = sbr.rel (%p393) target = $region36
        $region35: #{tpu_custom_call.1} parent=31 // pred_region
          %396 = dma.done %s389, 256
        $region36: #{tpu_custom_call.1} parent=31 // pred_fallthru
          _
        %s397 = sand.u32 %s45, 1
        %s398 = scalar_lea.sflag [#allocation10], %s397
        %s399 = sand.u32 %s142, 1
        %s400 = smul.addr %s399, 16
        %s401 = scalar_lea.vmem [#allocation9], %s400
        // Predicated region
        $region37: #{tpu_custom_call.1} parent=31 // pred_check
          %p402 = pneg %p155
        $region38: #{tpu_custom_call.1} parent=31 // pred_check_branch
          %404 = sbr.rel (%p402) target = $region40
        $region39: #{tpu_custom_call.1} parent=31 // pred_region
          %405 = dma.done %s398, 256
        $region40: #{tpu_custom_call.1} parent=31 // pred_fallthru
          _
        %s406 = sand.u32 %s45, 1
        %s407 = scalar_lea.sflag [#allocation10], %s406
        %s408 = sand.u32 %s190, 1
        %s409 = smul.addr %s408, 16
        %s410 = scalar_lea.vmem [#allocation11], %s409
        // Predicated region
        $region41: #{tpu_custom_call.1} parent=31 // pred_check
          %p411 = pneg %p203
        $region42: #{tpu_custom_call.1} parent=31 // pred_check_branch
          %413 = sbr.rel (%p411) target = $region44
        $region43: #{tpu_custom_call.1} parent=31 // pred_region
          %414 = dma.done %s407, 256
        $region44: #{tpu_custom_call.1} parent=31 // pred_fallthru
          _
        %s415 = sand.u32 %s94, 1
        %s416 = scalar_lea.sflag [#allocation7], %s415
        %s417 = sand.u32 %s94, 1
        %s418 = smul.addr %s417, 16
        %s419 = scalar_lea.vmem [#allocation6], %s418
        %p420 = pneg %p107
        %p421 = pneg %p104
        %s422 = sand.u32 %s45, 1
        %s423 = scalar_lea.sflag [#allocation10], %s422
        %s424 = sand.u32 %s142, 1
        %s425 = smul.addr %s424, 16
        %s426 = scalar_lea.vmem [#allocation9], %s425
        %p427 = pneg %p155
        %p428 = pneg %p152
        %s429 = sand.u32 %s45, 1
        %s430 = scalar_lea.sflag [#allocation10], %s429
        %s431 = sand.u32 %s190, 1
        %s432 = smul.addr %s431, 16
        %s433 = scalar_lea.vmem [#allocation11], %s432
        %p434 = pneg %p203
        %p435 = pneg %p200
        %p436 = pneg %p233
        %p437 = pneg %p230
        %s438 = sand.u32 %s220, 1
        %s439 = scalar_lea.sflag [#allocation8], %s438
        %s440 = sand.u32 %s220, 1
        %s441 = smul.addr %s440, 8
        %s442 = scalar_lea.vmem [#allocation12], %s441
        %p443 = pneg %p263
        %p444 = pneg %p260
        %s445 = sand.u32 %s250, 1
        %s446 = scalar_lea.sflag [#allocation14], %s445
        %s447 = sand.u32 %s250, 1
        %s448 = smul.addr %s447, 8
        %s449 = scalar_lea.vmem [#allocation13], %s448
        %s450 = smul.u32 %s50, 2
        %s451 = sadd.s32 %s450, %s51
        %s452 = sshra.s32 %s52, 7
        %s453 = sand.u32 %s52, 127
        %s454 = sadd.s32 %s452, %s451
        %s455 = smul.u32 %s454, 128
        %s456 = sshra.s32 %s52, 7
        %s457 = sand.u32 %s52, 127
        %s458 = sadd.s32 %s455, %s457
        %s459 = sld [smem:[#allocation4 + %s458]]
        %s460 = smul.u32 2, %s459
        %s461 = smul.u32 %s50, 2
        %s462 = sadd.s32 %s461, %s51
        %s463 = sshra.s32 %s52, 7
        %s464 = sand.u32 %s52, 127
        %s465 = sadd.s32 %s463, %s462
        %s466 = smul.u32 %s465, 128
        %s467 = sshra.s32 %s52, 7
        %s468 = sand.u32 %s52, 127
        %s469 = sadd.s32 %s466, %s468
        %s470 = sld [smem:[#allocation4 + %s469]]
        %s471 = smul.u32 2, %s470
        %s472 = smul.u32 %s50, 2
        %s473 = sadd.s32 %s472, %s51
        %s474 = sshra.s32 %s52, 7
        %s475 = sand.u32 %s52, 127
        %s476 = sadd.s32 %s474, %s473
        %s477 = smul.u32 %s476, 128
        %s478 = sshra.s32 %s52, 7
        %s479 = sand.u32 %s52, 127
        %s480 = sadd.s32 %s477, %s479
        %s481 = sld [smem:[#allocation4 + %s480]]
        %s482 = smul.u32 2, %s481
        %s483 = smul.u32 %s50, 2
        %s484 = sadd.s32 %s483, %s51
        %s485 = smul.u32 %s50, 2
        %s486 = sadd.s32 %s485, %s51
        %s487 = smul.u32 %s50, 2
        %s488 = sadd.s32 %s487, %s51
        %p489 = scmp.eq.s32.totalorder %s52, 0
        // Predicated region
        $region45: #{tpu_custom_call.1} parent=31 // pred_check
          %p490 = pneg %p489
        $region46: #{tpu_custom_call.1} parent=31 // pred_check_branch
          %492 = sbr.rel (%p490) target = $region48
        $region47: #{tpu_custom_call.1} parent=31 // pred_region
          %493 = vst [vmem:[%s442] sm:$0xff] 0.0
          %494 = vst [vmem:[%s449] sm:$0xff] 0.0
        $region48: #{tpu_custom_call.1} parent=31 // pred_fallthru
          _
        %s495 = sld [smem:[#allocation5 + %s488]]
        %p496 = scmp.lt.s32.totalorder %s52, %s495
        // Predicated region
        $region49: #{tpu_custom_call.1} parent=31 // pred_check
          %p497 = pneg %p496
        $region50: #{tpu_custom_call.1} parent=31 // pred_check_branch
          %499 = sbr.rel (%p497) target = $region52
        $region51: #{tpu_custom_call.1} parent=31 // pred_region
          %v500 = vld [vmem:[%s392] sm:$0xff]
          %v501 = vld [vmem:[%s392 + $0x8] sm:$0xff]
          %v502 = vld [vmem:[%s401] sm:$0xff]
          %v503 = vld [vmem:[%s401 + $0x8] sm:$0xff]
          %vm504 = vcmp.gt.f32.partialorder %v502, 0.5
          %vm505 = vcmp.gt.f32.partialorder %v503, 0.5
          %v506 = vld [vmem:[%s410] sm:$0xff]
          %v507 = vld [vmem:[%s410 + $0x8] sm:$0xff]
          %vm508 = vcmp.gt.f32.partialorder %v506, 0.5
          %vm509 = vcmp.gt.f32.partialorder %v507, 0.5
          %vm510 = vmand %vm504, %vm508
          %vm511 = vmand %vm505, %vm509
          %s512 = sld [smem:[#allocation3 + %s50]]
          %s513 = ssub.f32 1.0, %s512
          %s514 = sadd.f32 %s512, 1.0
          %v515 = vsub.f32 0.0, %v500
          %v516 = vsub.f32 0.0, %v501
          %v517 = vmax.f32 %v515, 0.0
          %v518 = vmax.f32 %v516, 0.0
          %v519 = vand.u32 2147483647, %v500
          %v520 = vand.u32 2147483647, %v501
          %v521 = vsub.f32 0.0, %v519
          %v522 = vsub.f32 0.0, %v520
          %v523 = vmul.f32 %v521, 1.442695
          %v524 = vpow.pop %v523
          %v525 = vmul.f32 %v522, 1.442695
          %v526 = vpow.pop %v525
          %v527 = vadd.f32 %v524, 1.0
          %v528 = vlog2.pop %v527
          %v529 = vmul.f32 %v528, 0.6931472
          %v530 = vmul.f32 -0.5, %v524
          %v531 = vadd.f32 %v530, 1.0
          %v532 = vmul.f32 %v531, %v524
          %v533 = vand.u32 2147483647, %v524
          %vm534 = vcmp.lt.f32.partialorder %v533, 0.0004427343
          %v535 = vsel %vm534, %v532, %v529
          %v536 = vadd.f32 %v526, 1.0
          %v537 = vlog2.pop %v536
          %v538 = vmul.f32 %v537, 0.6931472
          %v539 = vmul.f32 -0.5, %v526
          %v540 = vadd.f32 %v539, 1.0
          %v541 = vmul.f32 %v540, %v526
          %v542 = vand.u32 2147483647, %v526
          %vm543 = vcmp.lt.f32.partialorder %v542, 0.0004427343
          %v544 = vsel %vm543, %v541, %v538
          %v545 = vadd.f32 %v517, %v535
          %v546 = vadd.f32 %v518, %v544
          %v547 = vstv %s513
          %v548 = vmul.f32 %v547, %v500
          %v549 = vmul.f32 %v547, %v501
          %v550 = vstv %s514
          %v551 = vmul.f32 %v550, %v545
          %v552 = vmul.f32 %v550, %v546
          %v553 = vadd.f32 %v548, %v551
          %v554 = vadd.f32 %v549, %v552
          %v555 = vsel %vm510, %v553, 0.0
          %v556 = vsel %vm511, %v554, 0.0
          %v557 = vld [vmem:[%s442] sm:$0xff]
          %v558 = vadd.f32 %v555, %v556
          %v559 = vadd.f32 %v557, %v558
          %560 = vst [vmem:[%s442] sm:$0xff] %v559
          %v561 = vld [vmem:[%s449] sm:$0xff]
          %v562 = vsel %vm510, 1, 0
          %v563 = vsel %vm511, 1, 0
          %v564 = vcvt.s32.f32 %v562
          %v565 = vcvt.s32.f32 %v563
          %v566 = vadd.f32 %v564, %v565
          %v567 = vadd.f32 %v561, %v566
          %568 = vst [vmem:[%s449] sm:$0xff] %v567
        $region52: #{tpu_custom_call.1} parent=31 // pred_fallthru
          _
        %s569 = sand.u32 %s220, 1
        %s570 = scalar_lea.sflag [#allocation8], %s569
        %s571 = sand.u32 %s220, 1
        %s572 = smul.addr %s571, 8
        %s573 = scalar_lea.vmem [#allocation12], %s572
        %s574 = sand.u32 %s250, 1
        %s575 = scalar_lea.sflag [#allocation14], %s574
        %s576 = sand.u32 %s250, 1
        %s577 = smul.addr %s576, 8
        %s578 = scalar_lea.vmem [#allocation13], %s577
        // Predicated region
        $region53: #{tpu_custom_call.1} parent=31 // pred_check
          %p579 = pneg %p230
        $region54: #{tpu_custom_call.1} parent=31 // pred_check_branch
          %581 = sbr.rel (%p579) target = $region56
        $region55: #{tpu_custom_call.1} parent=31 // pred_region
          %s582 = smul.u32 %s50, 2
          %s583 = sadd.s32 %s582, %s51
          %s585 = ssub.s32 128, 128
          %586 = vsyncadd %s570, %s585
          %s587 = smul.addr %s583, 128
          %s588 = scalar_lea.hbm %s6, %s587
          %s590 = sshll.u32 %s573, 4
          %s591 = int_to_ptr.vmem [resolvable:$true] %s590
          %593 = dma.vmem_to_hbm [thread:$0]  %s591, 128, %s588, %s570
        $region56: #{tpu_custom_call.1} parent=31 // pred_fallthru
          _
        // Predicated region
        $region57: #{tpu_custom_call.1} parent=31 // pred_check
          %p594 = pneg %p260
        $region58: #{tpu_custom_call.1} parent=31 // pred_check_branch
          %596 = sbr.rel (%p594) target = $region60
        $region59: #{tpu_custom_call.1} parent=31 // pred_region
          %s597 = smul.u32 %s50, 2
          %s598 = sadd.s32 %s597, %s51
          %s600 = ssub.s32 128, 128
          %601 = vsyncadd %s575, %s600
          %s602 = smul.addr %s598, 128
          %s603 = scalar_lea.hbm %s7, %s602
          %s605 = sshll.u32 %s578, 4
          %s606 = int_to_ptr.vmem [resolvable:$true] %s605
          %608 = dma.vmem_to_hbm [thread:$0]  %s606, 128, %s603, %s575
        $region60: #{tpu_custom_call.1} parent=31 // pred_fallthru
          _
      $region32: #{tpu_custom_call.1} parent=5 // pred_fallthru
        _
      %p609 = scmp.le.s32.totalorder 2, %s40
      // Predicated region
      $region61: #{tpu_custom_call.1} parent=5 // pred_check
        %p610 = pneg %p609
      $region62: #{tpu_custom_call.1} parent=5 // pred_check_branch
        %612 = sbr.rel (%p610) target = $region64
      $region63: #{tpu_custom_call.1} parent=5 // pred_region
        %s613 = ssub.s32 %s40, 2
        // Predicated region
        $region65: #{tpu_custom_call.1} parent=63 // pred_check
          %p614 = pneg %p236
        $region66: #{tpu_custom_call.1} parent=63 // pred_check_branch
          %616 = sbr.rel (%p614) target = $region68
        $region67: #{tpu_custom_call.1} parent=63 // pred_region
          %s617 = sand.u32 %s221, 1
          %s618 = scalar_lea.sflag [#allocation8], %s617
          %s619 = sand.u32 %s221, 1
          %s620 = smul.addr %s619, 8
          %s621 = scalar_lea.vmem [#allocation12], %s620
          %622 = dma.done %s618, 128
        $region68: #{tpu_custom_call.1} parent=63 // pred_fallthru
          _
        // Predicated region
        $region69: #{tpu_custom_call.1} parent=63 // pred_check
          %p623 = pneg %p266
        $region70: #{tpu_custom_call.1} parent=63 // pred_check_branch
          %625 = sbr.rel (%p623) target = $region72
        $region71: #{tpu_custom_call.1} parent=63 // pred_region
          %s626 = sand.u32 %s251, 1
          %s627 = scalar_lea.sflag [#allocation14], %s626
          %s628 = sand.u32 %s251, 1
          %s629 = smul.addr %s628, 8
          %s630 = scalar_lea.vmem [#allocation13], %s629
          %631 = dma.done %s627, 128
        $region72: #{tpu_custom_call.1} parent=63 // pred_fallthru
          _
      $region64: #{tpu_custom_call.1} parent=5 // pred_fallthru
        _
    $region6: #{tpu_custom_call.1} parent=1 // loop_footer
      %s44 = sadd.s32 1, %s40
    $region7: #{tpu_custom_call.1} parent=1 // loop_footer_branch
      %39 = sbr.rel target = $region3
    $region8: #{tpu_custom_call.1} parent=1 // loop_exit
      _
    %632 = vsyncpa [#allocation7], 1
    %s633 = scalar_lea.sflag [#allocation7], 1
    %634 = vsyncpa %s633, 1
    %635 = vsyncpa [#allocation10], 1
    %s636 = scalar_lea.sflag [#allocation10], 1
    %637 = vsyncpa %s636, 1
    %638 = vsyncpa [#allocation8], 1
    %s639 = scalar_lea.sflag [#allocation8], 1
    %640 = vsyncpa %s639, 1
    %641 = vsyncpa [#allocation14], 1
    %s642 = scalar_lea.sflag [#allocation14], 1
    %643 = vsyncpa %s642, 1

</llo_original>
